<compile_context>
chip_gen: v7x
topology: tpu7x:2x2x1
jax: 0.10.0
libtpu: 0.0.40
codegen_flags: <defaults>
</compile_context>

<pallas_src>
import jax
import jax.numpy as jnp
from jax.experimental import pallas as pl
from jax.experimental.pallas import tpu as pltpu


def _mlp_kernel(x_ref, w1_ref, b1_ref, w2_ref, b2_ref, w3_ref, b3_ref, o_ref):
    # In-kernel bf16 cast of the streamed x tile (VPU pack, hidden under DMA/MXU).
    x = x_ref[...].astype(jnp.bfloat16)
    # fc1 + ReLU : (TM, D) @ (D, 64) bf16 on the MXU, f32 accumulate.
    h1 = jnp.dot(x, w1_ref[...], preferred_element_type=jnp.float32)
    h1 = jnp.maximum(h1 + b1_ref[...], 0.0)
    # fc2 + ReLU : keep the MXU on its native bf16 datapath.
    h2 = jnp.dot(h1.astype(jnp.bfloat16), w2_ref[...],
                 preferred_element_type=jnp.float32)
    h2 = jnp.maximum(h2 + b2_ref[...], 0.0)
    # fc3 computed "transposed": contract the (1, 64) weight row against the
    # hidden dim of (TM, 64) -> (1, TM).  Lane-dense output row (no masked
    # (TM, 1) partial stores); any relayout of h2 rides the XLU slot.
    logits = jax.lax.dot_general(
        w3_ref[...], h2.astype(jnp.bfloat16),
        dimension_numbers=(((1,), (1,)), ((), ())),
        preferred_element_type=jnp.float32)                  # (1, TM)
    o_ref[...] = (logits + b3_ref[...]).astype(o_ref.dtype)  # b3 (1,1) broadcasts


def _round_up(n, m):
    return ((n + m - 1) // m) * m


def disease_predictor_forward(x, params, *, block_batch=2048):
    """Forward pass of DiseasePredictor.

    x: (B, input_dim) float32 (streamed to the kernel as-is; cast to bf16 in-kernel)
    params: dict with w1 (D,64), b1 (1,64), w2 (64,64), b2 (1,64),
            w3 (64,1), b3 (1,1)  -- weights stored as (in, out).
    block_batch: max batch tile size; MUST be a multiple of 128 (TM is the lane
            dimension of the transposed (1, TM) output row).
    returns: (B, 1) float32
    """
    B, D = x.shape
    assert block_batch % 128 == 0, "block_batch must be a multiple of 128"

    # --- pick the batch tile TM ------------------------------------------------
    TM = int(block_batch)
    # Don't use a tile much larger than the batch, and prefer >=2 tiles so the
    # "parallel" batch axis can feed both TensorCores on v7x (no-op on v5e/v6e).
    TM = min(TM, max(128, _round_up(pl.cdiv(B, 2), 128)))
    # Keep double-buffered x + h1/h2 temporaries well under the default scoped
    # VMEM on every generation (v7x TensorCore: 64 MiB physical / 32 MiB scoped).
    per_row_bytes = 2 * D * x.dtype.itemsize + 768   # 2x x tile + f32/bf16 hiddens
    max_tm_vmem = max(128, ((16 << 20) // per_row_bytes) // 128 * 128)
    TM = min(TM, max_tm_vmem)
    num_tiles = pl.cdiv(B, TM)

    # Tiny, one-time casts of the VMEM-resident weights to the MXU's bf16 path.
    w1 = params["w1"].astype(jnp.bfloat16)                   # (D, 64)
    w2 = params["w2"].astype(jnp.bfloat16)                   # (64, 64)
    w3 = params["w3"].reshape(1, 64).astype(jnp.bfloat16)    # (1, 64) row
    b1 = params["b1"].astype(jnp.float32)                    # (1, 64)
    b2 = params["b2"].astype(jnp.float32)                    # (1, 64)
    b3 = params["b3"].reshape(1, 1).astype(jnp.float32)      # (1, 1)

    # Weights/biases stay VMEM-resident across the batch grid (constant index map).
    def resident(a):
        return pl.BlockSpec(a.shape, lambda i: (0,) * a.ndim)

    flops = 2 * B * (D * 64 + 64 * 64 + 64)
    bytes_accessed = (x.size * x.dtype.itemsize
                      + (w1.size + w2.size + w3.size) * 2
                      + (b1.size + b2.size + b3.size) * 4
                      + num_tiles * TM * 4)

    out = pl.pallas_call(
        _mlp_kernel,
        out_shape=jax.ShapeDtypeStruct((num_tiles, 1, TM), jnp.float32),
        grid=(num_tiles,),
        in_specs=[
            # x streamed / pipelined over the batch; the last block may be a
            # Pallas-padded partial block (garbage rows -> garbage output lanes
            # that are sliced off below).
            pl.BlockSpec((TM, D), lambda i: (i, 0)),
            resident(w1), resident(b1),
            resident(w2), resident(b2),
            resident(w3), resident(b3),
        ],
        # Squeezed leading dim: kernel sees a lane-dense (1, TM) output row per tile.
        out_specs=pl.BlockSpec((None, 1, TM), lambda i: (i, 0, 0)),
        compiler_params=pltpu.CompilerParams(
            dimension_semantics=("parallel",)),        # 2-TC sharding on v7x
        cost_estimate=pl.CostEstimate(
            flops=flops, transcendentals=0, bytes_accessed=bytes_accessed),
    )(x, w1, b1, w2, b2, w3, b3)

    return out.reshape(num_tiles * TM, 1)[:B]


def init_params(key, input_dim):
    """Deterministic init mimicking PyTorch nn.Linear default (U[-1/sqrt(fan_in), +])."""
    def linear(k, fan_in, fan_out):
        kw, kb = jax.random.split(k)
        bound = 1.0 / jnp.sqrt(fan_in)
        w = jax.random.uniform(kw, (fan_in, fan_out), jnp.float32, -bound, bound)
        b = jax.random.uniform(kb, (1, fan_out), jnp.float32, -bound, bound)
        return w, b

    k1, k2, k3 = jax.random.split(key, 3)
    w1, b1 = linear(k1, input_dim, 64)
    w2, b2 = linear(k2, 64, 64)
    w3, b3 = linear(k3, 64, 1)
    return {"w1": w1, "b1": b1, "w2": w2, "b2": b2, "w3": w3, "b3": b3}


def reference_forward(x, p):
    h1 = jnp.maximum(x @ p["w1"] + p["b1"], 0.0)
    h2 = jnp.maximum(h1 @ p["w2"] + p["b2"], 0.0)
    return h2 @ p["w3"] + p["b3"]


if __name__ == "__main__":
    key = jax.random.PRNGKey(0)
    kx, kp = jax.random.split(key)

    batch, input_dim = 8, 32
    x = jax.random.normal(kx, (batch, input_dim), jnp.float32)
    params = init_params(kp, input_dim)

    out = jax.block_until_ready(disease_predictor_forward(x, params))
    ref = reference_forward(x, params)
    assert out.shape == (batch, 1)
    # bf16 matmuls -> relaxed tolerance vs. the f32 reference
    assert jnp.allclose(out, ref, atol=3e-2, rtol=3e-2), float(jnp.max(jnp.abs(out - ref)))

    # Also exercise the multi-tile + ragged (padded last block) path of the grid.
    batch2 = 300
    x2 = jax.random.normal(kx, (batch2, input_dim), jnp.float32)
    out2 = jax.block_until_ready(
        disease_predictor_forward(x2, params, block_batch=128))
    ref2 = reference_forward(x2, params)
    assert out2.shape == (batch2, 1)
    assert jnp.allclose(out2, ref2, atol=3e-2, rtol=3e-2), float(jnp.max(jnp.abs(out2 - ref2)))

    print("KERNEL_OK")
</pallas_src>

<mosaic_0001>
module attributes {stable_mosaic.version = 11 : i64} {
  func.func @_mlp_kernel(%arg0: i32, %arg1: memref<128x32xf32, #tpu.memory_space<vmem>>, %arg2: memref<32x64xbf16, #tpu.memory_space<vmem>>, %arg3: memref<1x64xf32, #tpu.memory_space<vmem>>, %arg4: memref<64x64xbf16, #tpu.memory_space<vmem>>, %arg5: memref<1x64xf32, #tpu.memory_space<vmem>>, %arg6: memref<1x64xbf16, #tpu.memory_space<vmem>>, %arg7: memref<1x1xf32, #tpu.memory_space<vmem>>, %arg8: memref<1x1x128xf32, #tpu.memory_space<vmem>>) attributes {dimension_semantics = [#tpu.dimension_semantics<parallel>], iteration_bounds = array<i64: 1>, scalar_prefetch = 0 : i64, scratch_operands = 0 : i64, tpu.core_type = #tpu.core_type<tc>, window_params = [{transform_indices = @transform_0, window_bounds = array<i64: 128, 32>}, {pipeline_mode = #tpu.pipeline_mode<synchronous>, transform_indices = @transform_1, window_bounds = array<i64: 32, 64>}, {pipeline_mode = #tpu.pipeline_mode<synchronous>, transform_indices = @transform_2, window_bounds = array<i64: 1, 64>}, {pipeline_mode = #tpu.pipeline_mode<synchronous>, transform_indices = @transform_3, window_bounds = array<i64: 64, 64>}, {pipeline_mode = #tpu.pipeline_mode<synchronous>, transform_indices = @transform_4, window_bounds = array<i64: 1, 64>}, {pipeline_mode = #tpu.pipeline_mode<synchronous>, transform_indices = @transform_5, window_bounds = array<i64: 1, 64>}, {pipeline_mode = #tpu.pipeline_mode<synchronous>, transform_indices = @transform_6, window_bounds = array<i64: 1, 1>}, {transform_indices = @transform_7, window_bounds = array<i64: 1, 1, 128>}]} {
    %c0 = arith.constant 0 : index
    %c0_0 = arith.constant 0 : index
    %0 = vector.load %arg1[%c0, %c0_0] : memref<128x32xf32, #tpu.memory_space<vmem>>, vector<128x32xf32>
    %1 = arith.truncf %0 : vector<128x32xf32> to vector<128x32xbf16>
    %c0_1 = arith.constant 0 : index
    %c0_2 = arith.constant 0 : index
    %2 = vector.load %arg2[%c0_1, %c0_2] : memref<32x64xbf16, #tpu.memory_space<vmem>>, vector<32x64xbf16>
    %cst = arith.constant dense<0.000000e+00> : vector<128x64xf32>
    %3 = tpu.matmul %1, %2, %cst {dimension_numbers = #tpu.dot_dimension_numbers<[1], [0], [0], [1], [0, 0, 1, 1], [], []>} : vector<128x32xbf16>, vector<32x64xbf16>, vector<128x64xf32> -> vector<128x64xf32>
    %c0_3 = arith.constant 0 : index
    %c0_4 = arith.constant 0 : index
    %4 = vector.load %arg3[%c0_3, %c0_4] : memref<1x64xf32, #tpu.memory_space<vmem>>, vector<1x64xf32>
    %5 = vector.broadcast %4 : vector<1x64xf32> to vector<128x64xf32>
    %6 = arith.addf %3, %5 : vector<128x64xf32>
    %cst_5 = arith.constant 0.000000e+00 : f32
    %7 = vector.broadcast %cst_5 : f32 to vector<128x64xf32>
    %8 = arith.maximumf %6, %7 : vector<128x64xf32>
    %9 = arith.truncf %8 : vector<128x64xf32> to vector<128x64xbf16>
    %c0_6 = arith.constant 0 : index
    %c0_7 = arith.constant 0 : index
    %10 = vector.load %arg4[%c0_6, %c0_7] : memref<64x64xbf16, #tpu.memory_space<vmem>>, vector<64x64xbf16>
    %cst_8 = arith.constant dense<0.000000e+00> : vector<128x64xf32>
    %11 = tpu.matmul %9, %10, %cst_8 {dimension_numbers = #tpu.dot_dimension_numbers<[1], [0], [0], [1], [0, 0, 1, 1], [], []>} : vector<128x64xbf16>, vector<64x64xbf16>, vector<128x64xf32> -> vector<128x64xf32>
    %c0_9 = arith.constant 0 : index
    %c0_10 = arith.constant 0 : index
    %12 = vector.load %arg5[%c0_9, %c0_10] : memref<1x64xf32, #tpu.memory_space<vmem>>, vector<1x64xf32>
    %13 = vector.broadcast %12 : vector<1x64xf32> to vector<128x64xf32>
    %14 = arith.addf %11, %13 : vector<128x64xf32>
    %cst_11 = arith.constant 0.000000e+00 : f32
    %15 = vector.broadcast %cst_11 : f32 to vector<128x64xf32>
    %16 = arith.maximumf %14, %15 : vector<128x64xf32>
    %c0_12 = arith.constant 0 : index
    %c0_13 = arith.constant 0 : index
    %17 = vector.load %arg6[%c0_12, %c0_13] : memref<1x64xbf16, #tpu.memory_space<vmem>>, vector<1x64xbf16>
    %18 = arith.truncf %16 : vector<128x64xf32> to vector<128x64xbf16>
    %cst_14 = arith.constant dense<0.000000e+00> : vector<1x128xf32>
    %19 = tpu.matmul %17, %18, %cst_14 {dimension_numbers = #tpu.dot_dimension_numbers<[1], [1], [0], [0], [0, 0, 1, 0], [], []>} : vector<1x64xbf16>, vector<128x64xbf16>, vector<1x128xf32> -> vector<1x128xf32>
    %c0_15 = arith.constant 0 : index
    %c0_16 = arith.constant 0 : index
    %20 = vector.load %arg7[%c0_15, %c0_16] : memref<1x1xf32, #tpu.memory_space<vmem>>, vector<1x1xf32>
    %21 = vector.broadcast %20 : vector<1x1xf32> to vector<1x128xf32>
    %22 = arith.addf %19, %21 : vector<1x128xf32>
    %c0_17 = arith.constant 0 : index
    %c0_18 = arith.constant 0 : index
    %c0_19 = arith.constant 0 : index
    %23 = vector.load %arg8[%c0_17, %c0_18, %c0_19] : memref<1x1x128xf32, #tpu.memory_space<vmem>>, vector<1x1x128xf32>
    %24 = vector.shape_cast %23 : vector<1x1x128xf32> to vector<1x128xf32>
    %25 = vector.shape_cast %22 : vector<1x128xf32> to vector<1x1x128xf32>
    tpu.vector_store %arg8[%c0_17, %c0_18, %c0_19], %25 {strides = array<i32>} : memref<1x1x128xf32, #tpu.memory_space<vmem>>, vector<1x1x128xf32>,
    return
  }
  func.func @transform_0(%arg0: i32) -> (i32, i32) {
    %c0_i32 = arith.constant 0 : i32
    %c0_i32_0 = arith.constant 0 : i32
    return %arg0, %c0_i32 : i32, i32
  }
  func.func @transform_1(%arg0: i32) -> (i32, i32) {
    %c0_i32 = arith.constant 0 : i32
    %c0_i32_0 = arith.constant 0 : i32
    %c0_i32_1 = arith.constant 0 : i32
    return %c0_i32, %c0_i32_0 : i32, i32
  }
  func.func @transform_2(%arg0: i32) -> (i32, i32) {
    %c0_i32 = arith.constant 0 : i32
    %c0_i32_0 = arith.constant 0 : i32
    %c0_i32_1 = arith.constant 0 : i32
    return %c0_i32, %c0_i32_0 : i32, i32
  }
  func.func @transform_3(%arg0: i32) -> (i32, i32) {
    %c0_i32 = arith.constant 0 : i32
    %c0_i32_0 = arith.constant 0 : i32
    %c0_i32_1 = arith.constant 0 : i32
    return %c0_i32, %c0_i32_0 : i32, i32
  }
  func.func @transform_4(%arg0: i32) -> (i32, i32) {
    %c0_i32 = arith.constant 0 : i32
    %c0_i32_0 = arith.constant 0 : i32
    %c0_i32_1 = arith.constant 0 : i32
    return %c0_i32, %c0_i32_0 : i32, i32
  }
  func.func @transform_5(%arg0: i32) -> (i32, i32) {
    %c0_i32 = arith.constant 0 : i32
    %c0_i32_0 = arith.constant 0 : i32
    %c0_i32_1 = arith.constant 0 : i32
    return %c0_i32, %c0_i32_0 : i32, i32
  }
  func.func @transform_6(%arg0: i32) -> (i32, i32) {
    %c0_i32 = arith.constant 0 : i32
    %c0_i32_0 = arith.constant 0 : i32
    %c0_i32_1 = arith.constant 0 : i32
    return %c0_i32, %c0_i32_0 : i32, i32
  }
  func.func @transform_7(%arg0: i32) -> (i32, i32, i32) {
    %c0_i32 = arith.constant 0 : i32
    %c0_i32_0 = arith.constant 0 : i32
    %c0_i32_1 = arith.constant 0 : i32
    return %arg0, %c0_i32, %c0_i32_0 : i32, i32, i32
  }
}

</mosaic_0001>

<llo_original>
// kernel: tpu_custom_call.1
$region0: #{tpu_custom_call.1}
  #allocation0 [shape = 'u32[]', space=smem, size = 0x4, offset = 0x4, fixed_abs, tag = 'smem constant byte address 0x4 - core index']
  #allocation1 [shape = 'u32[144,128]{1,0:T(1,128)}', space=vmem, size = 0x12000, scoped, tag = 'internal scratch']
  #allocation2 [shape = 'f32[1,1]{1,0:T(1,128)S(1)}', space=vmem, size = 0x200, scoped, tag = 'scoped memory for tpu_custom_call.1']
  %s0 = inlined_call_operand.hbm [shape: f32[8,32], index: 0, kind: input, shape index: {}]
  %s1 = inlined_call_operand.hbm [shape: bf16[32,64], index: 1, kind: input, shape index: {}]
  %s2 = inlined_call_operand.vmem [shape: f32[1,64], index: 2, kind: input, shape index: {}]
  %s3 = inlined_call_operand.hbm [shape: bf16[64,64], index: 3, kind: input, shape index: {}]
  %s4 = inlined_call_operand.vmem [shape: f32[1,64], index: 4, kind: input, shape index: {}]
  %s5 = inlined_call_operand.vmem [shape: bf16[1,64], index: 5, kind: input, shape index: {}]
  %s6 = inlined_call_operand.<no memory space> [shape: f32[1,1], index: 6, kind: input, shape index: {}]
  %s7 = inlined_call_operand.hbm [shape: f32[1,1,128], index: 7, kind: output, shape index: {}]
  %s8 = sld [smem:[#allocation0]]
  $region50: #{tpu_custom_call.1} parent=0
    _
  %s10 = ssub.s32 1, %s8
  %s11 = scalar_select 0, %s10, %s8
  %v12 = vstv %s6
  %13 = vst [vmem:[#allocation2] sm:$0x1] %v12
  $region1: #{tpu_custom_call.1} parent=0
    #allocation3 [shape = 'u8[65536]{0}', space=vmem, size = 0x10000, scoped, tag = 'input window, operand 0, single buffered']
    #allocation4 [shape = 's32[1]{0}', space=sflag, size = 0x4, scoped, tag = 'scoped memory for tpu_custom_call.1']
    #allocation5 [shape = 's32[1]{0}', space=sflag, size = 0x4, scoped, tag = 'scoped memory for tpu_custom_call.1']
    #allocation6 [shape = 'u8[8192]{0}', space=vmem, size = 0x2000, scoped, tag = 'input window, operand 1, single buffered']
    #allocation7 [shape = 's32[1]{0}', space=sflag, size = 0x4, scoped, tag = 'scoped memory for tpu_custom_call.1']
    #allocation8 [shape = 'u8[16384]{0}', space=vmem, size = 0x4000, scoped, tag = 'input window, operand 3, single buffered']
    #allocation9 [shape = 'u8[512]{0}', space=vmem, size = 0x400, scoped, tag = 'output window, operand 0, single buffered']
    %14 = vsyncpa [#allocation4], 0
    %15 = vsyncpa [#allocation7], 0
    %16 = vsyncpa [#allocation5], 0
    // Predicated region
    $region2: #{tpu_custom_call.1} parent=1 // pred_check
      _
    $region3: #{tpu_custom_call.1} parent=1 // pred_check_branch
      %18 = sbr.rel (0) target = $region5
    $region4: #{tpu_custom_call.1} parent=1 // pred_region
      %s20 = ssub.s32 2048, 128
      %21 = vsyncadd [#allocation4], %s20
      %s22 = sshll.u32 [#allocation3], 4
      %s23 = int_to_ptr.vmem [resolvable:$true] %s22
      %28 = dma.hbm_to_vmem [thread:$0]  %s0, 128, %s23, [#allocation4], 128, 128, 8
    $region5: #{tpu_custom_call.1} parent=1 // pred_fallthru
      _
    // Predicated region
    $region6: #{tpu_custom_call.1} parent=1 // pred_check
      _
    $region7: #{tpu_custom_call.1} parent=1 // pred_check_branch
      %30 = sbr.rel (0) target = $region9
    $region8: #{tpu_custom_call.1} parent=1 // pred_region
      %s32 = ssub.s32 256, 256
      %33 = vsyncadd [#allocation7], %s32
      %s34 = sshll.u32 [#allocation6], 4
      %s35 = int_to_ptr.vmem [resolvable:$true] %s34
      %40 = dma.hbm_to_vmem [thread:$0]  %s1, 256, %s35, [#allocation7], 64, 64, 4
    $region9: #{tpu_custom_call.1} parent=1 // pred_fallthru
      _
    // Predicated region
    $region10: #{tpu_custom_call.1} parent=1 // pred_check
      _
    $region11: #{tpu_custom_call.1} parent=1 // pred_check_branch
      %42 = sbr.rel (0) target = $region13
    $region12: #{tpu_custom_call.1} parent=1 // pred_region
      _
    $region13: #{tpu_custom_call.1} parent=1 // pred_fallthru
      _
    // Predicated region
    $region14: #{tpu_custom_call.1} parent=1 // pred_check
      _
    $region15: #{tpu_custom_call.1} parent=1 // pred_check_branch
      %44 = sbr.rel (0) target = $region17
    $region16: #{tpu_custom_call.1} parent=1 // pred_region
      %s46 = ssub.s32 512, 512
      %47 = vsyncadd [#allocation7], %s46
      %s48 = sshll.u32 [#allocation8], 4
      %s49 = int_to_ptr.vmem [resolvable:$true] %s48
      %54 = dma.hbm_to_vmem [thread:$0]  %s3, 512, %s49, [#allocation7], 64, 64, 4
    $region17: #{tpu_custom_call.1} parent=1 // pred_fallthru
      _
    // Predicated region
    $region18: #{tpu_custom_call.1} parent=1 // pred_check
      _
    $region19: #{tpu_custom_call.1} parent=1 // pred_check_branch
      %56 = sbr.rel (0) target = $region21
    $region20: #{tpu_custom_call.1} parent=1 // pred_region
      _
    $region21: #{tpu_custom_call.1} parent=1 // pred_fallthru
      _
    // Predicated region
    $region22: #{tpu_custom_call.1} parent=1 // pred_check
      _
    $region23: #{tpu_custom_call.1} parent=1 // pred_check_branch
      %58 = sbr.rel (0) target = $region25
    $region24: #{tpu_custom_call.1} parent=1 // pred_region
      _
    $region25: #{tpu_custom_call.1} parent=1 // pred_fallthru
      _
    // Predicated region
    $region26: #{tpu_custom_call.1} parent=1 // pred_check
      _
    $region27: #{tpu_custom_call.1} parent=1 // pred_check_branch
      %60 = sbr.rel (0) target = $region29
    $region28: #{tpu_custom_call.1} parent=1 // pred_region
      _
    $region29: #{tpu_custom_call.1} parent=1 // pred_fallthru
      _
    // Predicated region
    $region30: #{tpu_custom_call.1} parent=1 // pred_check
      _
    $region31: #{tpu_custom_call.1} parent=1 // pred_check_branch
      %62 = sbr.rel (0) target = $region33
    $region32: #{tpu_custom_call.1} parent=1 // pred_region
      %63 = dma.done [#allocation4], 2048
    $region33: #{tpu_custom_call.1} parent=1 // pred_fallthru
      _
    // Predicated region
    $region34: #{tpu_custom_call.1} parent=1 // pred_check
      _
    $region35: #{tpu_custom_call.1} parent=1 // pred_check_branch
      %65 = sbr.rel (0) target = $region37
    $region36: #{tpu_custom_call.1} parent=1 // pred_region
      %66 = dma.done [#allocation7], 256
    $region37: #{tpu_custom_call.1} parent=1 // pred_fallthru
      _
    // Predicated region
    $region38: #{tpu_custom_call.1} parent=1 // pred_check
      _
    $region39: #{tpu_custom_call.1} parent=1 // pred_check_branch
      %68 = sbr.rel (0) target = $region41
    $region40: #{tpu_custom_call.1} parent=1 // pred_region
      %69 = dma.done [#allocation7], 512
    $region41: #{tpu_custom_call.1} parent=1 // pred_fallthru
      _
    %v71 = vld [vmem:[#allocation3] sm:$0xff]
    %v72 = vld [vmem:[#allocation3 + $0x8] sm:$0xff]
    %v73 = vld [vmem:[#allocation3 + $0x10] sm:$0xff]
    %v74 = vld [vmem:[#allocation3 + $0x18] sm:$0xff]
    %v75 = vld [vmem:[#allocation3 + $0x20] sm:$0xff]
    %v76 = vld [vmem:[#allocation3 + $0x28] sm:$0xff]
    %v77 = vld [vmem:[#allocation3 + $0x30] sm:$0xff]
    %v78 = vld [vmem:[#allocation3 + $0x38] sm:$0xff]
    %v79 = vld [vmem:[#allocation3 + $0x40] sm:$0xff]
    %v80 = vld [vmem:[#allocation3 + $0x48] sm:$0xff]
    %v81 = vld [vmem:[#allocation3 + $0x50] sm:$0xff]
    %v82 = vld [vmem:[#allocation3 + $0x58] sm:$0xff]
    %v83 = vld [vmem:[#allocation3 + $0x60] sm:$0xff]
    %v84 = vld [vmem:[#allocation3 + $0x68] sm:$0xff]
    %v85 = vld [vmem:[#allocation3 + $0x70] sm:$0xff]
    %v86 = vld [vmem:[#allocation3 + $0x78] sm:$0xff]
    %v87 = vpack.c.bf16 %v72, %v71
    %v88 = vpack.c.bf16 %v74, %v73
    %v89 = vpack.c.bf16 %v76, %v75
    %v90 = vpack.c.bf16 %v78, %v77
    %v91 = vpack.c.bf16 %v80, %v79
    %v92 = vpack.c.bf16 %v82, %v81
    %v93 = vpack.c.bf16 %v84, %v83
    %v94 = vpack.c.bf16 %v86, %v85
    %v95 = vld [vmem:[#allocation6] sm:$0xf]
    %v96 = vld [vmem:[#allocation6 + $0x4] sm:$0xf]
    %v97 = vld [vmem:[#allocation6 + $0x8] sm:$0xf]
    %v98 = vld [vmem:[#allocation6 + $0xc] sm:$0xf]
    %v99 = vld [vmem:[%s2] sm:$0x1]
    %v101 = vlaneseq
    %v102 = vshrl.u32 %v101, 7
    %v103 = vsub.s32 0, %v102
    %v104 = vrot.slane %v99, %v103
    %v110 = vunpack.c.l.b16 %v95
    %v111 = vunpack.c.l.b16 %v96
    %v112 = vunpack.c.l.b16 %v97
    %v113 = vunpack.c.l.b16 %v98
    %v114 = vpack.c.b16 %v111, %v110
    %v115 = vpack.c.b16 %v113, %v112
    %vm118 = vcmask 261120
    %v120 = vsel %vm118, %v87, 0
    %v123 = vsel %vm118, %v88, 0
    %v126 = vsel %vm118, %v89, 0
    %v129 = vsel %vm118, %v90, 0
    %v132 = vsel %vm118, %v91, 0
    %v135 = vsel %vm118, %v92, 0
    %v138 = vsel %vm118, %v93, 0
    %v141 = vsel %vm118, %v94, 0
    %143 = vmatprep.subr.bf16.mxu0 0
    %144 = vmatpush1.bf16.msra.mxu0 %v114
    %145 = vmatprep.subr.bf16.mxu0 0
    %146 = vmatpush1.bf16.msra.mxu0 %v115
    %147 = vmatprep.subr.bf16.mxu0 0
    %148 = vmatpush1.bf16.msra.mxu0 0
    %149 = vmatprep.subr.bf16.mxu0 0
    %150 = vmatpush1.bf16.msra.mxu0 0
    %151 = vmatprep.subr.bf16.mxu0 0
    %152 = vmatpush1.bf16.msra.mxu0 0
    %153 = vmatprep.subr.bf16.mxu0 0
    %154 = vmatpush1.bf16.msra.mxu0 0
    %155 = vmatprep.subr.bf16.mxu0 0
    %156 = vmatpush1.bf16.msra.mxu0 0
    %157 = vmatprep.subr.bf16.mxu0 0
    %158 = vmatpush1.bf16.msra.mxu0 0
    %159 = vmatprep.subr.bf16.mxu0 0
    %160 = vmatpush1.bf16.msra.mxu0 0
    %161 = vmatprep.subr.bf16.mxu0 0
    %162 = vmatpush1.bf16.msra.mxu0 0
    %163 = vmatprep.subr.bf16.mxu0 0
    %164 = vmatpush1.bf16.msra.mxu0 0
    %165 = vmatprep.subr.bf16.mxu0 0
    %166 = vmatpush1.bf16.msra.mxu0 0
    %167 = vmatprep.subr.bf16.mxu0 0
    %168 = vmatpush1.bf16.msra.mxu0 0
    %169 = vmatprep.subr.bf16.mxu0 0
    %170 = vmatpush1.bf16.msra.mxu0 0
    %171 = vmatprep.subr.bf16.mxu0 0
    %172 = vmatpush1.bf16.msra.mxu0 0
    %173 = vmatprep.subr.bf16.mxu0 0
    %174 = vmatpush1.bf16.msra.mxu0 0
    %175 = vmatprep.mubr.bf16.mxu0 0
    %176 = vmatmul.mubr.bf16.gmra.mrb[0].mxu0 %v120
    %v177 = vpop.f32.mrb[0].mxu0
    %v178 = vadd.f32 %v104, %v177
    %v179 = vpop.f32.mrb[0].mxu0
    %v180 = vpop.f32.mrb[0].mxu0
    %v181 = vadd.f32 %v104, %v180
    %v182 = vpop.f32.mrb[0].mxu0
    %183 = vmatprep.mubr.bf16.mxu0 0
    %184 = vmatmul.mubr.bf16.gmra.mrb[0].mxu0 %v123
    %v185 = vpop.f32.mrb[0].mxu0
    %v186 = vadd.f32 %v104, %v185
    %v187 = vpop.f32.mrb[0].mxu0
    %v188 = vpop.f32.mrb[0].mxu0
    %v189 = vadd.f32 %v104, %v188
    %v190 = vpop.f32.mrb[0].mxu0
    %191 = vmatprep.mubr.bf16.mxu0 0
    %192 = vmatmul.mubr.bf16.gmra.mrb[0].mxu0 %v126
    %v193 = vpop.f32.mrb[0].mxu0
    %v194 = vadd.f32 %v104, %v193
    %v195 = vpop.f32.mrb[0].mxu0
    %v196 = vpop.f32.mrb[0].mxu0
    %v197 = vadd.f32 %v104, %v196
    %v198 = vpop.f32.mrb[0].mxu0
    %199 = vmatprep.mubr.bf16.mxu0 0
    %200 = vmatmul.mubr.bf16.gmra.mrb[0].mxu0 %v129
    %v201 = vpop.f32.mrb[0].mxu0
    %v202 = vadd.f32 %v104, %v201
    %v203 = vpop.f32.mrb[0].mxu0
    %v204 = vpop.f32.mrb[0].mxu0
    %v205 = vadd.f32 %v104, %v204
    %v206 = vpop.f32.mrb[0].mxu0
    %207 = vmatprep.mubr.bf16.mxu0 0
    %208 = vmatmul.mubr.bf16.gmra.mrb[0].mxu0 %v132
    %v209 = vpop.f32.mrb[0].mxu0
    %v210 = vadd.f32 %v104, %v209
    %v211 = vpop.f32.mrb[0].mxu0
    %v212 = vpop.f32.mrb[0].mxu0
    %v213 = vadd.f32 %v104, %v212
    %v214 = vpop.f32.mrb[0].mxu0
    %215 = vmatprep.mubr.bf16.mxu0 0
    %216 = vmatmul.mubr.bf16.gmra.mrb[0].mxu0 %v135
    %v217 = vpop.f32.mrb[0].mxu0
    %v218 = vadd.f32 %v104, %v217
    %v219 = vpop.f32.mrb[0].mxu0
    %v220 = vpop.f32.mrb[0].mxu0
    %v221 = vadd.f32 %v104, %v220
    %v222 = vpop.f32.mrb[0].mxu0
    %223 = vmatprep.mubr.bf16.mxu0 0
    %224 = vmatmul.mubr.bf16.gmra.mrb[0].mxu0 %v138
    %v225 = vpop.f32.mrb[0].mxu0
    %v226 = vadd.f32 %v104, %v225
    %v227 = vpop.f32.mrb[0].mxu0
    %v228 = vpop.f32.mrb[0].mxu0
    %v229 = vadd.f32 %v104, %v228
    %v230 = vpop.f32.mrb[0].mxu0
    %231 = vmatprep.mubr.bf16.mxu0 0
    %232 = vmatmul.mubr.bf16.gmra.mrb[0].mxu0 %v141
    %v233 = vpop.f32.mrb[0].mxu0
    %v234 = vadd.f32 %v104, %v233
    %v235 = vpop.f32.mrb[0].mxu0
    %v236 = vpop.f32.mrb[0].mxu0
    %v237 = vadd.f32 %v104, %v236
    %v238 = vpop.f32.mrb[0].mxu0
    %239 = vdwg.mxu0
    %v240 = vmax.f32 %v178, 0.0
    %v241 = vmax.f32 %v181, 0.0
    %v242 = vmax.f32 %v186, 0.0
    %v243 = vmax.f32 %v189, 0.0
    %v244 = vmax.f32 %v194, 0.0
    %v245 = vmax.f32 %v197, 0.0
    %v246 = vmax.f32 %v202, 0.0
    %v247 = vmax.f32 %v205, 0.0
    %v248 = vmax.f32 %v210, 0.0
    %v249 = vmax.f32 %v213, 0.0
    %v250 = vmax.f32 %v218, 0.0
    %v251 = vmax.f32 %v221, 0.0
    %v252 = vmax.f32 %v226, 0.0
    %v253 = vmax.f32 %v229, 0.0
    %v254 = vmax.f32 %v234, 0.0
    %v255 = vmax.f32 %v237, 0.0
    %v256 = vpack.c.bf16 %v241, %v240
    %v257 = vpack.c.bf16 %v243, %v242
    %v258 = vpack.c.bf16 %v245, %v244
    %v259 = vpack.c.bf16 %v247, %v246
    %v260 = vpack.c.bf16 %v249, %v248
    %v261 = vpack.c.bf16 %v251, %v250
    %v262 = vpack.c.bf16 %v253, %v252
    %v263 = vpack.c.bf16 %v255, %v254
    %v264 = vld [vmem:[#allocation8] sm:$0xf]
    %v265 = vld [vmem:[#allocation8 + $0x4] sm:$0xf]
    %v266 = vld [vmem:[#allocation8 + $0x8] sm:$0xf]
    %v267 = vld [vmem:[#allocation8 + $0xc] sm:$0xf]
    %v268 = vld [vmem:[#allocation8 + $0x10] sm:$0xf]
    %v269 = vld [vmem:[#allocation8 + $0x14] sm:$0xf]
    %v270 = vld [vmem:[#allocation8 + $0x18] sm:$0xf]
    %v271 = vld [vmem:[#allocation8 + $0x1c] sm:$0xf]
    %v272 = vld [vmem:[%s4] sm:$0x1]
    %v274 = vlaneseq
    %v275 = vshrl.u32 %v274, 7
    %v276 = vsub.s32 0, %v275
    %v277 = vrot.slane %v272, %v276
    %v287 = vunpack.c.l.b16 %v264
    %v288 = vunpack.c.l.b16 %v265
    %v289 = vunpack.c.l.b16 %v266
    %v290 = vunpack.c.l.b16 %v267
    %v291 = vunpack.c.l.b16 %v268
    %v292 = vunpack.c.l.b16 %v269
    %v293 = vunpack.c.l.b16 %v270
    %v294 = vunpack.c.l.b16 %v271
    %v295 = vpack.c.b16 %v288, %v287
    %v296 = vpack.c.b16 %v290, %v289
    %v297 = vpack.c.b16 %v292, %v291
    %v298 = vpack.c.b16 %v294, %v293
    %vm303 = vcmask 523264
    %v305 = vsel %vm303, %v256, 0
    %v308 = vsel %vm303, %v257, 0
    %v311 = vsel %vm303, %v258, 0
    %v314 = vsel %vm303, %v259, 0
    %v317 = vsel %vm303, %v260, 0
    %v320 = vsel %vm303, %v261, 0
    %v323 = vsel %vm303, %v262, 0
    %v326 = vsel %vm303, %v263, 0
    %328 = vmatprep.subr.bf16.mxu0 0
    %329 = vmatpush1.bf16.msra.mxu0 %v295
    %330 = vmatprep.subr.bf16.mxu0 0
    %331 = vmatpush1.bf16.msra.mxu0 %v296
    %332 = vmatprep.subr.bf16.mxu0 0
    %333 = vmatpush1.bf16.msra.mxu0 %v297
    %334 = vmatprep.subr.bf16.mxu0 0
    %335 = vmatpush1.bf16.msra.mxu0 %v298
    %336 = vmatprep.subr.bf16.mxu0 0
    %337 = vmatpush1.bf16.msra.mxu0 0
    %338 = vmatprep.subr.bf16.mxu0 0
    %339 = vmatpush1.bf16.msra.mxu0 0
    %340 = vmatprep.subr.bf16.mxu0 0
    %341 = vmatpush1.bf16.msra.mxu0 0
    %342 = vmatprep.subr.bf16.mxu0 0
    %343 = vmatpush1.bf16.msra.mxu0 0
    %344 = vmatprep.subr.bf16.mxu0 0
    %345 = vmatpush1.bf16.msra.mxu0 0
    %346 = vmatprep.subr.bf16.mxu0 0
    %347 = vmatpush1.bf16.msra.mxu0 0
    %348 = vmatprep.subr.bf16.mxu0 0
    %349 = vmatpush1.bf16.msra.mxu0 0
    %350 = vmatprep.subr.bf16.mxu0 0
    %351 = vmatpush1.bf16.msra.mxu0 0
    %352 = vmatprep.subr.bf16.mxu0 0
    %353 = vmatpush1.bf16.msra.mxu0 0
    %354 = vmatprep.subr.bf16.mxu0 0
    %355 = vmatpush1.bf16.msra.mxu0 0
    %356 = vmatprep.subr.bf16.mxu0 0
    %357 = vmatpush1.bf16.msra.mxu0 0
    %358 = vmatprep.subr.bf16.mxu0 0
    %359 = vmatpush1.bf16.msra.mxu0 0
    %360 = vmatprep.mubr.bf16.mxu0 0
    %361 = vmatmul.mubr.bf16.gmra.mrb[0].mxu0 %v305
    %v362 = vpop.f32.mrb[0].mxu0
    %v363 = vadd.f32 %v277, %v362
    %v364 = vpop.f32.mrb[0].mxu0
    %v365 = vpop.f32.mrb[0].mxu0
    %v366 = vadd.f32 %v277, %v365
    %v367 = vpop.f32.mrb[0].mxu0
    %368 = vmatprep.mubr.bf16.mxu0 0
    %369 = vmatmul.mubr.bf16.gmra.mrb[0].mxu0 %v308
    %v370 = vpop.f32.mrb[0].mxu0
    %v371 = vadd.f32 %v277, %v370
    %v372 = vpop.f32.mrb[0].mxu0
    %v373 = vpop.f32.mrb[0].mxu0
    %v374 = vadd.f32 %v277, %v373
    %v375 = vpop.f32.mrb[0].mxu0
    %376 = vmatprep.mubr.bf16.mxu0 0
    %377 = vmatmul.mubr.bf16.gmra.mrb[0].mxu0 %v311
    %v378 = vpop.f32.mrb[0].mxu0
    %v379 = vadd.f32 %v277, %v378
    %v380 = vpop.f32.mrb[0].mxu0
    %v381 = vpop.f32.mrb[0].mxu0
    %v382 = vadd.f32 %v277, %v381
    %v383 = vpop.f32.mrb[0].mxu0
    %384 = vmatprep.mubr.bf16.mxu0 0
    %385 = vmatmul.mubr.bf16.gmra.mrb[0].mxu0 %v314
    %v386 = vpop.f32.mrb[0].mxu0
    %v387 = vadd.f32 %v277, %v386
    %v388 = vpop.f32.mrb[0].mxu0
    %v389 = vpop.f32.mrb[0].mxu0
    %v390 = vadd.f32 %v277, %v389
    %v391 = vpop.f32.mrb[0].mxu0
    %392 = vmatprep.mubr.bf16.mxu0 0
    %393 = vmatmul.mubr.bf16.gmra.mrb[0].mxu0 %v317
    %v394 = vpop.f32.mrb[0].mxu0
    %v395 = vadd.f32 %v277, %v394
    %v396 = vpop.f32.mrb[0].mxu0
    %v397 = vpop.f32.mrb[0].mxu0
    %v398 = vadd.f32 %v277, %v397
    %v399 = vpop.f32.mrb[0].mxu0
    %400 = vmatprep.mubr.bf16.mxu0 0
    %401 = vmatmul.mubr.bf16.gmra.mrb[0].mxu0 %v320
    %v402 = vpop.f32.mrb[0].mxu0
    %v403 = vadd.f32 %v277, %v402
    %v404 = vpop.f32.mrb[0].mxu0
    %v405 = vpop.f32.mrb[0].mxu0
    %v406 = vadd.f32 %v277, %v405
    %v407 = vpop.f32.mrb[0].mxu0
    %408 = vmatprep.mubr.bf16.mxu0 0
    %409 = vmatmul.mubr.bf16.gmra.mrb[0].mxu0 %v323
    %v410 = vpop.f32.mrb[0].mxu0
    %v411 = vadd.f32 %v277, %v410
    %v412 = vpop.f32.mrb[0].mxu0
    %v413 = vpop.f32.mrb[0].mxu0
    %v414 = vadd.f32 %v277, %v413
    %v415 = vpop.f32.mrb[0].mxu0
    %416 = vmatprep.mubr.bf16.mxu0 0
    %417 = vmatmul.mubr.bf16.gmra.mrb[0].mxu0 %v326
    %v418 = vpop.f32.mrb[0].mxu0
    %v419 = vadd.f32 %v277, %v418
    %v420 = vpop.f32.mrb[0].mxu0
    %v421 = vpop.f32.mrb[0].mxu0
    %v422 = vadd.f32 %v277, %v421
    %v423 = vpop.f32.mrb[0].mxu0
    %424 = vdwg.mxu0
    %v425 = vmax.f32 %v363, 0.0
    %v426 = vmax.f32 %v366, 0.0
    %v427 = vmax.f32 %v371, 0.0
    %v428 = vmax.f32 %v374, 0.0
    %v429 = vmax.f32 %v379, 0.0
    %v430 = vmax.f32 %v382, 0.0
    %v431 = vmax.f32 %v387, 0.0
    %v432 = vmax.f32 %v390, 0.0
    %v433 = vmax.f32 %v395, 0.0
    %v434 = vmax.f32 %v398, 0.0
    %v435 = vmax.f32 %v403, 0.0
    %v436 = vmax.f32 %v406, 0.0
    %v437 = vmax.f32 %v411, 0.0
    %v438 = vmax.f32 %v414, 0.0
    %v439 = vmax.f32 %v419, 0.0
    %v440 = vmax.f32 %v422, 0.0
    %v441 = vld [vmem:[%s5] sm:$0x1]
    %v442 = vpack.c.bf16 %v426, %v425
    %v443 = vpack.c.bf16 %v428, %v427
    %v444 = vpack.c.bf16 %v430, %v429
    %v445 = vpack.c.bf16 %v432, %v431
    %v446 = vpack.c.bf16 %v434, %v433
    %v447 = vpack.c.bf16 %v436, %v435
    %v448 = vpack.c.bf16 %v438, %v437
    %v449 = vpack.c.bf16 %v440, %v439
    %v450 = vld [vmem:[#allocation2] sm:$0x1]
    %452 = vset.pattern.permute.xlu0 0
    %453 = vperm.xlu0 %452, %v450
    %v454 = vpop.permute.xlu0 %453
    %v456 = vlaneseq
    %v457 = vshrl.u32 %v456, 7
    %v458 = vsub.s32 0, %v457
    %v459 = vrot.slane %v454, %v458
    %v461 = vsel %vm303, %v441, 0
    %v464 = vsel %vm303, %v442, 0
    %v467 = vsel %vm303, %v443, 0
    %v470 = vsel %vm303, %v444, 0
    %v473 = vsel %vm303, %v445, 0
    %v476 = vsel %vm303, %v446, 0
    %v479 = vsel %vm303, %v447, 0
    %v482 = vsel %vm303, %v448, 0
    %v485 = vsel %vm303, %v449, 0
    %487 = vmatprep.subr.bf16.mxu0 0
    %488 = vmatpush1.bf16.xpose.msra.mxu0 %v464
    %489 = vmatprep.subr.bf16.mxu0 0
    %490 = vmatpush1.bf16.xpose.msra.mxu0 %v467
    %491 = vmatprep.subr.bf16.mxu0 0
    %492 = vmatpush1.bf16.xpose.msra.mxu0 %v470
    %493 = vmatprep.subr.bf16.mxu0 0
    %494 = vmatpush1.bf16.xpose.msra.mxu0 %v473
    %495 = vmatprep.subr.bf16.mxu0 0
    %496 = vmatpush1.bf16.xpose.msra.mxu0 %v476
    %497 = vmatprep.subr.bf16.mxu0 0
    %498 = vmatpush1.bf16.xpose.msra.mxu0 %v479
    %499 = vmatprep.subr.bf16.mxu0 0
    %500 = vmatpush1.bf16.xpose.msra.mxu0 %v482
    %501 = vmatprep.subr.bf16.mxu0 0
    %502 = vmatpush1.bf16.xpose.msra.mxu0 %v485
    %503 = vmatprep.subr.bf16.mxu0 0
    %504 = vmatpush1.bf16.xpose.msra.mxu0 0
    %505 = vmatprep.subr.bf16.mxu0 0
    %506 = vmatpush1.bf16.xpose.msra.mxu0 0
    %507 = vmatprep.subr.bf16.mxu0 0
    %508 = vmatpush1.bf16.xpose.msra.mxu0 0
    %509 = vmatprep.subr.bf16.mxu0 0
    %510 = vmatpush1.bf16.xpose.msra.mxu0 0
    %511 = vmatprep.subr.bf16.mxu0 0
    %512 = vmatpush1.bf16.xpose.msra.mxu0 0
    %513 = vmatprep.subr.bf16.mxu0 0
    %514 = vmatpush1.bf16.xpose.msra.mxu0 0
    %515 = vmatprep.subr.bf16.mxu0 0
    %516 = vmatpush1.bf16.xpose.msra.mxu0 0
    %517 = vmatprep.subr.bf16.mxu0 0
    %518 = vmatpush1.bf16.xpose.msra.mxu0 0
    %519 = vmatprep.mubr.bf16.mxu0 0
    %520 = vmatmul.mubr.bf16.gmra.mrb[0].mxu0 %v461
    %v521 = vpop.f32.mrb[0].mxu0
    %v522 = vadd.f32 %v459, %v521
    %v523 = vpop.f32.mrb[0].mxu0
    %v524 = vpop.f32.mrb[0].mxu0
    %v525 = vpop.f32.mrb[0].mxu0
    %526 = vdwg.mxu0
    %527 = vst [vmem:[#allocation9] sm:$0x1] %v522
    // Predicated region
    $region42: #{tpu_custom_call.1} parent=1 // pred_check
      _
    $region43: #{tpu_custom_call.1} parent=1 // pred_check_branch
      %529 = sbr.rel (0) target = $region45
    $region44: #{tpu_custom_call.1} parent=1 // pred_region
      %s531 = ssub.s32 16, 16
      %532 = vsyncadd [#allocation5], %s531
      %s534 = sshll.u32 [#allocation9], 4
      %s535 = int_to_ptr.vmem [resolvable:$true] %s534
      %537 = dma.vmem_to_hbm [thread:$0]  %s535, 16, %s7, [#allocation5]
    $region45: #{tpu_custom_call.1} parent=1 // pred_fallthru
      _
    // Predicated region
    $region46: #{tpu_custom_call.1} parent=1 // pred_check
      _
    $region47: #{tpu_custom_call.1} parent=1 // pred_check_branch
      %539 = sbr.rel (0) target = $region49
    $region48: #{tpu_custom_call.1} parent=1 // pred_region
      %540 = dma.done [#allocation5], 16
    $region49: #{tpu_custom_call.1} parent=1 // pred_fallthru
      _
    %541 = vsyncpa [#allocation4], 1
    %542 = vsyncpa [#allocation7], 1
    %543 = vsyncpa [#allocation5], 1

</llo_original>
